<compile_context>
chip_gen: v7x
topology: tpu7x:2x2x1
jax: 0.10.0
libtpu: 0.0.40
codegen_flags: <defaults>
</compile_context>

<pallas_src>
import functools
import numpy as np
import jax
import jax.numpy as jnp
from jax import lax
from jax.experimental import pallas as pl
from jax.experimental.pallas import tpu as pltpu


def _round_up(x, m):
    return (x + m - 1) // m * m


# ---------------------------------------------------------------------------
# Pallas kernel 1: batched matmul with fused BN(eval) scale/bias (+ optional ReLU)
# ---------------------------------------------------------------------------
def _mm_bn_act_kernel(a_ref, b_ref, s_ref, c_ref, o_ref, acc_ref, *, relu):
    k = pl.program_id(3)

    @pl.when(k == 0)
    def _():
        acc_ref[...] = jnp.zeros_like(acc_ref)

    acc_ref[...] += jnp.dot(a_ref[...], b_ref[...],
                            preferred_element_type=jnp.float32)

    @pl.when(k == pl.num_programs(3) - 1)
    def _():
        y = acc_ref[...] * s_ref[...] + c_ref[...]
        if relu:
            y = jnp.maximum(y, 0.0)
        o_ref[...] = y.astype(o_ref.dtype)


def matmul_bn_act(a, b, scale, bias, relu):
    """(G,M,K) @ (G,K,N), bf16 inputs / f32 accumulation, fused per-N scale/bias (+ReLU)."""
    G, M, K = a.shape
    _, _, N = b.shape
    a = a.astype(jnp.bfloat16)
    b = b.astype(jnp.bfloat16)

    # N: keep the output lane axis dense (multiple of 128); use 256-wide tiles when possible.
    Np = _round_up(N, 128)
    tn = 256 if Np % 256 == 0 else 128
    # M: pad only to the sublane multiple of 8 (batch-1 deep layers have M = 4..64).
    tm = min(256, _round_up(M, 8))
    Mp = _round_up(M, tm)
    # K: fully resident when small (no 128-padding), otherwise tile at 512 (K innermost).
    if K <= 2048:
        Kp = _round_up(K, 8)
        tk = Kp
    else:
        tk = 512
        Kp = _round_up(K, tk)

    if (Mp, Kp) != (M, K):
        a = jnp.pad(a, ((0, 0), (0, Mp - M), (0, Kp - K)))
    if (Kp, Np) != (K, N):
        b = jnp.pad(b, ((0, 0), (0, Kp - K), (0, Np - N)))
    s = scale if Np == N else jnp.pad(scale, ((0, 0), (0, Np - N)))
    c = bias if Np == N else jnp.pad(bias, ((0, 0), (0, Np - N)))
    s = s.reshape(G, 1, Np).astype(jnp.float32)
    c = c.reshape(G, 1, Np).astype(jnp.float32)

    grid = (G, Mp // tm, Np // tn, Kp // tk)
    # Explicit VMEM budget: double-buffered bf16 A/B tiles, double-buffered f32 out tile,
    # f32 accumulator, scale/bias rows; generous headroom but well under v7x's 64 MiB.
    need = 2 * 2 * (tm * tk + tk * tn) + 2 * 4 * tm * tn + 4 * tm * tn + 4 * 4 * tn
    vmem_limit = int(min(64 * 1024 * 1024, max(need + (8 << 20), 16 << 20)))

    out = pl.pallas_call(
        functools.partial(_mm_bn_act_kernel, relu=relu),
        out_shape=jax.ShapeDtypeStruct((G, Mp, Np), jnp.float32),
        grid_spec=pltpu.PrefetchScalarGridSpec(
            num_scalar_prefetch=0,
            grid=grid,
            in_specs=[
                pl.BlockSpec((None, tm, tk), lambda g, i, j, k: (g, i, k)),
                pl.BlockSpec((None, tk, tn), lambda g, i, j, k: (g, k, j)),
                pl.BlockSpec((None, 1, tn), lambda g, i, j, k: (g, 0, j)),
                pl.BlockSpec((None, 1, tn), lambda g, i, j, k: (g, 0, j)),
            ],
            out_specs=pl.BlockSpec((None, tm, tn), lambda g, i, j, k: (g, i, j)),
            scratch_shapes=[pltpu.VMEM((tm, tn), jnp.float32)],
        ),
        compiler_params=pltpu.CompilerParams(
            dimension_semantics=("parallel", "parallel", "parallel", "arbitrary"),
            vmem_limit_bytes=vmem_limit),
    )(a, b, s, c)
    if (Mp, Np) != (M, N):
        out = out[:, :M, :N]
    return out


# ---------------------------------------------------------------------------
# Pallas kernel 2: SE gating + residual + ReLU (tiled over H*W)
# ---------------------------------------------------------------------------
def _se_res_relu_kernel(x_ref, g_ref, r_ref, o_ref):
    gate = jax.nn.sigmoid(g_ref[...])
    o_ref[...] = jnp.maximum(x_ref[...] * gate + r_ref[...], 0.0).astype(o_ref.dtype)


def se_residual_relu(out, gate_pre, residual):
    """relu(out * sigmoid(gate_pre) + residual); gate broadcast over the spatial axis."""
    B, H, W, C = out.shape
    HW = H * W
    # spatial tile: <= ~1 MiB per f32 operand block, multiple of 8 rows, <= 512 rows
    ts = max(8, min(512, ((1 << 20) // (C * 4)) // 8 * 8))
    if HW <= ts:
        ts, HWp = HW, HW
    else:
        HWp = _round_up(HW, ts)
    x3 = out.reshape(B, HW, C)
    r3 = residual.reshape(B, HW, C)
    if HWp != HW:
        x3 = jnp.pad(x3, ((0, 0), (0, HWp - HW), (0, 0)))
        r3 = jnp.pad(r3, ((0, 0), (0, HWp - HW), (0, 0)))
    g3 = gate_pre.reshape(B, 1, C).astype(jnp.float32)
    y = pl.pallas_call(
        _se_res_relu_kernel,
        out_shape=jax.ShapeDtypeStruct((B, HWp, C), out.dtype),
        grid=(B, HWp // ts),
        in_specs=[
            pl.BlockSpec((None, ts, C), lambda b, s: (b, s, 0)),
            pl.BlockSpec((None, 1, C), lambda b, s: (b, 0, 0)),
            pl.BlockSpec((None, ts, C), lambda b, s: (b, s, 0)),
        ],
        out_specs=pl.BlockSpec((None, ts, C), lambda b, s: (b, s, 0)),
        compiler_params=pltpu.CompilerParams(
            dimension_semantics=("parallel", "parallel")),
    )(x3, g3, r3)
    if HWp != HW:
        y = y[:, :HW, :]
    return y.reshape(B, H, W, C)


# ---------------------------------------------------------------------------
# Convolution glue: im2col + Pallas matmul (with fused BN/bias + ReLU)
# ---------------------------------------------------------------------------
def _im2col(x, k, stride, pad):
    B, H, W, C = x.shape
    xp = jnp.pad(x, ((0, 0), (pad, pad), (pad, pad), (0, 0)))
    Ho = (H + 2 * pad - k) // stride + 1
    Wo = (W + 2 * pad - k) // stride + 1
    cols = []
    for i in range(k):
        for j in range(k):
            cols.append(xp[:, i:i + stride * Ho:stride, j:j + stride * Wo:stride, :])
    patches = jnp.stack(cols, axis=3)  # (B, Ho, Wo, k*k, C)
    return patches, Ho, Wo


def conv_block(x, p, stride=1, relu=False):
    """Conv2d (BN/bias folded into scale/bias) + optional ReLU, NHWC.

    Grouped convs arrive pre-packed as G super-groups of 128 output channels with a
    block-diagonal weight inside each super-group, so N is always lane-dense."""
    k = p['k']
    G, _, Ng = p['wm'].shape
    pad = k // 2
    x = x.astype(jnp.bfloat16)
    B, H, W, C = x.shape
    patches, Ho, Wo = _im2col(x, k, stride, pad)
    M = B * Ho * Wo
    if G == 1:
        a = patches.reshape(1, M, k * k * C)
        y = matmul_bn_act(a, p['wm'], p['scale'], p['bias'], relu)
        return y.reshape(B, Ho, Wo, Ng)
    csg = C // G
    a = patches.reshape(B, Ho, Wo, k * k, G, csg)
    a = jnp.transpose(a, (4, 0, 1, 2, 3, 5)).reshape(G, M, k * k * csg)
    y = matmul_bn_act(a, p['wm'], p['scale'], p['bias'], relu)       # (G, M, Ng)
    return jnp.transpose(y, (1, 0, 2)).reshape(B, Ho, Wo, G * Ng)


def maxpool_3x3_s2_ceil(x):
    # nn.MaxPool2d(3, stride=2, ceil_mode=True) -- exact for even H, W via -inf right/bottom pad.
    return lax.reduce_window(x, -jnp.inf, lax.max,
                             (1, 3, 3, 1), (1, 2, 2, 1),
                             ((0, 0), (0, 1), (0, 1), (0, 0)))


def upsample_bilinear(x, s):
    # matches F.interpolate(mode='bilinear', align_corners=False) half-pixel convention
    B, H, W, C = x.shape
    return jax.image.resize(x, (B, H * s, W * s, C), method='bilinear')


# ---------------------------------------------------------------------------
# Network building blocks (SE-ResNeXt bottleneck, decoder, etc.)
# ---------------------------------------------------------------------------
def bottleneck(x, p):
    out = conv_block(x, p['conv1'], relu=True)                        # 1x1
    out = conv_block(out, p['conv2'], stride=p['stride'], relu=True)  # 3x3 grouped (merged)
    out = conv_block(out, p['conv3'], relu=False)                     # 1x1
    if 'down' in p:
        residual = conv_block(x, p['down'], stride=p['stride'], relu=False)
    else:
        residual = x
    # SE module: global avg-pool + tiny fc1/fc2 run as plain XLA dots (M=1 matmuls are not
    # worth a Pallas launch); gating + residual + ReLU runs in the Pallas elementwise kernel.
    pooled = jnp.mean(out, axis=(1, 2))                               # (B, C) f32
    h = jnp.maximum(pooled @ p['fc1']['w'].T + p['fc1']['b'], 0.0)
    gate_pre = h @ p['fc2']['w'].T + p['fc2']['b']
    return se_residual_relu(out, gate_pre, residual)


def run_layer(x, blocks):
    for bp in blocks:
        x = bottleneck(x, bp)
    return x


def decoder(x, p):
    # TODO(synk): Decoder/ConvBnRelu2d class source was not included in the prompt; using the
    # standard definition for this repo (attention=None, reslink=False):
    # 2x bilinear upsample -> ConvBnRelu2d(3x3) -> ConvBnRelu2d(3x3).
    x = upsample_bilinear(x, 2)
    x = conv_block(x, p['conv1'], relu=True)
    x = conv_block(x, p['conv2'], relu=True)
    return x


def seresnext_unet_forward(x_nchw, params):
    x = jnp.transpose(x_nchw, (0, 2, 3, 1))                 # NCHW -> NHWC
    # layer0: 7x7/2 conv + BN + ReLU + maxpool 3x3/2 (ceil)
    x = conv_block(x, params['conv1'], stride=2, relu=True)
    x = maxpool_3x3_s2_ceil(x)
    e2 = run_layer(x, params['layer1'])
    e3 = run_layer(e2, params['layer2'])
    e4 = run_layer(e3, params['layer3'])
    e5 = run_layer(e4, params['layer4'])
    f = conv_block(e5, params['center1'], relu=True)
    f = conv_block(f, params['center2'], relu=True)
    d5 = decoder(jnp.concatenate([f, e5], axis=-1), params['decoder5'])
    d4 = decoder(jnp.concatenate([d5, e4], axis=-1), params['decoder4'])
    d3 = decoder(jnp.concatenate([d4, e3], axis=-1), params['decoder3'])
    d2 = decoder(jnp.concatenate([d3, e2], axis=-1), params['decoder2'])
    f = jnp.concatenate([d2,
                         upsample_bilinear(d3, 2),
                         upsample_bilinear(d4, 4),
                         upsample_bilinear(d5, 8)], axis=-1)
    logit = conv_block(f, params['logit1'], relu=True)
    logit = conv_block(logit, params['logit2'], relu=False)
    return jnp.transpose(logit, (0, 3, 1, 2))               # NHWC -> NCHW


# ---------------------------------------------------------------------------
# Deterministic synthetic parameters (pre-packed into matmul layout)
# ---------------------------------------------------------------------------
def make_params(seed=0):
    rng = np.random.default_rng(seed)

    def pack_conv(w, s, b, k, cin, cout, groups):
        """Pack weights into (G, K, N) matmul layout.  Grouped convs are merged into
        super-groups of exactly 128 output lanes with a block-diagonal weight inside
        each super-group (lane-dense N, minimal K/N padding)."""
        if groups == 1:
            wm = np.transpose(w, (2, 3, 1, 0)).reshape(1, k * k * cin, cout)
            sc, bi = s.reshape(1, cout), b.reshape(1, cout)
        else:
            cg, cog = cin // groups, cout // groups
            merge = max(1, min(groups, 128 // cog))      # groups merged per super-group
            G = groups // merge
            csg, cosg = merge * cg, merge * cog
            wm = np.zeros((G, k * k * csg, cosg), np.float32)
            wt = np.transpose(w, (2, 3, 1, 0))           # (k, k, cg, cout)
            for gi in range(groups):
                sg, l = divmod(gi, merge)
                blk = wt[:, :, :, gi * cog:(gi + 1) * cog].reshape(k * k, cg, cog)
                wm[sg].reshape(k * k, csg, cosg)[:, l * cg:(l + 1) * cg,
                                                 l * cog:(l + 1) * cog] = blk
            sc, bi = s.reshape(G, cosg), b.reshape(G, cosg)
        return dict(wm=jnp.asarray(wm, jnp.bfloat16),
                    scale=jnp.asarray(sc, dtype=jnp.float32),
                    bias=jnp.asarray(bi, dtype=jnp.float32), k=k)

    def conv_bn(cin, cout, k, groups=1):
        fan = (cin // groups) * k * k
        w = rng.standard_normal((cout, cin // groups, k, k), dtype=np.float32) / np.sqrt(fan)
        gamma = (1.0 + 0.05 * rng.standard_normal(cout)).astype(np.float32)
        beta = (0.05 * rng.standard_normal(cout)).astype(np.float32)
        mean = np.zeros(cout, np.float32)
        var = np.ones(cout, np.float32)
        s = gamma / np.sqrt(var + 1e-5)
        b = beta - mean * s
        return pack_conv(w, s, b, k, cin, cout, groups)

    def conv_bias(cin, cout, k):
        fan = cin * k * k
        w = rng.standard_normal((cout, cin, k, k), dtype=np.float32) / np.sqrt(fan)
        b = (0.02 * rng.standard_normal(cout)).astype(np.float32)
        return pack_conv(w, np.ones(cout, np.float32), b, k, cin, cout, 1)

    def fc(cin, cout):
        w = rng.standard_normal((cout, cin), dtype=np.float32) / np.sqrt(cin)
        b = (0.02 * rng.standard_normal(cout)).astype(np.float32)
        return dict(w=jnp.asarray(w), b=jnp.asarray(b))

    def bottleneck_params(inplanes, planes, stride, has_down):
        width = planes * 2                      # floor(planes*4/64)*32
        C = planes * 4
        p = dict(stride=stride,
                 conv1=conv_bn(inplanes, width, 1),
                 conv2=conv_bn(width, width, 3, groups=32),
                 conv3=conv_bn(width, C, 1),
                 fc1=fc(C, C // 16),
                 fc2=fc(C // 16, C))
        if has_down:
            p['down'] = conv_bn(inplanes, C, 1)
        return p

    def layer_params(inplanes, planes, blocks, stride):
        ps = [bottleneck_params(inplanes, planes, stride, True)]
        for _ in range(blocks - 1):
            ps.append(bottleneck_params(planes * 4, planes, 1, False))
        return ps

    def decoder_params(cin, ch, cout):
        return dict(conv1=conv_bn(cin, ch, 3), conv2=conv_bn(ch, cout, 3))

    return dict(
        conv1=conv_bn(3, 64, 7),
        layer1=layer_params(64, 64, 3, 1),
        layer2=layer_params(256, 128, 4, 2),
        layer3=layer_params(512, 256, 6, 2),
        layer4=layer_params(1024, 512, 3, 2),
        center1=conv_bn(2048, 512, 3),
        center2=conv_bn(512, 256, 3),
        decoder5=decoder_params(512 * 4 + 256, 512, 64),
        decoder4=decoder_params(256 * 4 + 64, 256, 64),
        decoder3=decoder_params(128 * 4 + 64, 128, 64),
        decoder2=decoder_params(64 * 4 + 64, 64, 64),
        logit1=conv_bn(256, 64, 3),
        logit2=conv_bias(64, 1, 1),
    )


if __name__ == "__main__":
    params = make_params(0)
    x = jax.random.normal(jax.random.PRNGKey(0), (1, 3, 64, 64), jnp.float32)
    logit = seresnext_unet_forward(x, params)
    logit = jax.block_until_ready(logit)
    assert logit.shape == (1, 1, 32, 32), logit.shape
    assert bool(jnp.all(jnp.isfinite(logit)))
    print("KERNEL_OK")
</pallas_src>

<mosaic_0001>
module attributes {stable_mosaic.version = 11 : i64} {
  func.func @_mm_bn_act_kernel(%arg0: i32, %arg1: i32, %arg2: i32, %arg3: i32, %arg4: memref<1x256x152xbf16, #tpu.memory_space<vmem>>, %arg5: memref<1x152x128xbf16, #tpu.memory_space<vmem>>, %arg6: memref<1x1x128xf32, #tpu.memory_space<vmem>>, %arg7: memref<1x1x128xf32, #tpu.memory_space<vmem>>, %arg8: memref<1x256x128xf32, #tpu.memory_space<vmem>>, %arg9: memref<256x128xf32, #tpu.memory_space<vmem>>) attributes {dimension_semantics = [#tpu.dimension_semantics<parallel>, #tpu.dimension_semantics<parallel>, #tpu.dimension_semantics<parallel>, #tpu.dimension_semantics<arbitrary>], iteration_bounds = array<i64: 1, 4, 1, 1>, scalar_prefetch = 0 : i64, scratch_operands = 1 : i64, tpu.core_type = #tpu.core_type<tc>, window_params = [{transform_indices = @transform_0, window_bounds = array<i64: 1, 256, 152>}, {transform_indices = @transform_1, window_bounds = array<i64: 1, 152, 128>}, {transform_indices = @transform_2, window_bounds = array<i64: 1, 1, 128>}, {transform_indices = @transform_3, window_bounds = array<i64: 1, 1, 128>}, {transform_indices = @transform_4, window_bounds = array<i64: 1, 256, 128>}]} {
    %c0_i32 = arith.constant 0 : i32
    %0 = arith.cmpi eq, %arg3, %c0_i32 : i32
    %1 = arith.extui %0 : i1 to i32
    %c0_i32_0 = arith.constant 0 : i32
    %2 = arith.cmpi ne, %1, %c0_i32_0 : i32
    scf.if %2 {
      %cst_12 = arith.constant 0.000000e+00 : f32
      %14 = vector.broadcast %cst_12 : f32 to vector<256x128xf32>
      %c0_13 = arith.constant 0 : index
      %c0_14 = arith.constant 0 : index
      %15 = vector.load %arg9[%c0_13, %c0_14] : memref<256x128xf32, #tpu.memory_space<vmem>>, vector<256x128xf32>
      tpu.vector_store %arg9[%c0_13, %c0_14], %14 {strides = array<i32>} : memref<256x128xf32, #tpu.memory_space<vmem>>, vector<256x128xf32>,
    } else {
    }
    %c0 = arith.constant 0 : index
    %c0_1 = arith.constant 0 : index
    %3 = vector.load %arg9[%c0, %c0_1] : memref<256x128xf32, #tpu.memory_space<vmem>>, vector<256x128xf32>
    %c0_2 = arith.constant 0 : index
    %c0_3 = arith.constant 0 : index
    %c0_4 = arith.constant 0 : index
    %4 = vector.load %arg4[%c0_2, %c0_3, %c0_4] : memref<1x256x152xbf16, #tpu.memory_space<vmem>>, vector<1x256x152xbf16>
    %5 = vector.shape_cast %4 : vector<1x256x152xbf16> to vector<256x152xbf16>
    %c0_5 = arith.constant 0 : index
    %c0_6 = arith.constant 0 : index
    %c0_7 = arith.constant 0 : index
    %6 = vector.load %arg5[%c0_5, %c0_6, %c0_7] : memref<1x152x128xbf16, #tpu.memory_space<vmem>>, vector<1x152x128xbf16>
    %7 = vector.shape_cast %6 : vector<1x152x128xbf16> to vector<152x128xbf16>
    %cst = arith.constant dense<0.000000e+00> : vector<256x128xf32>
    %8 = tpu.matmul %5, %7, %cst {dimension_numbers = #tpu.dot_dimension_numbers<[1], [0], [0], [1], [0, 0, 1, 1], [], []>} : vector<256x152xbf16>, vector<152x128xbf16>, vector<256x128xf32> -> vector<256x128xf32>
    %9 = arith.addf %3, %8 : vector<256x128xf32>
    %c0_8 = arith.constant 0 : index
    %c0_9 = arith.constant 0 : index
    %10 = vector.load %arg9[%c0_8, %c0_9] : memref<256x128xf32, #tpu.memory_space<vmem>>, vector<256x128xf32>
    tpu.vector_store %arg9[%c0_8, %c0_9], %9 {strides = array<i32>} : memref<256x128xf32, #tpu.memory_space<vmem>>, vector<256x128xf32>,
    %c0_i32_10 = arith.constant 0 : i32
    %11 = arith.cmpi eq, %arg3, %c0_i32_10 : i32
    %12 = arith.extui %11 : i1 to i32
    %c0_i32_11 = arith.constant 0 : i32
    %13 = arith.cmpi ne, %12, %c0_i32_11 : i32
    scf.if %13 {
      %c0_12 = arith.constant 0 : index
      %c0_13 = arith.constant 0 : index
      %14 = vector.load %arg9[%c0_12, %c0_13] : memref<256x128xf32, #tpu.memory_space<vmem>>, vector<256x128xf32>
      %c0_14 = arith.constant 0 : index
      %c0_15 = arith.constant 0 : index
      %c0_16 = arith.constant 0 : index
      %15 = vector.load %arg6[%c0_14, %c0_15, %c0_16] : memref<1x1x128xf32, #tpu.memory_space<vmem>>, vector<1x1x128xf32>
      %16 = vector.shape_cast %15 : vector<1x1x128xf32> to vector<1x128xf32>
      %17 = vector.broadcast %16 : vector<1x128xf32> to vector<256x128xf32>
      %18 = arith.mulf %14, %17 : vector<256x128xf32>
      %c0_17 = arith.constant 0 : index
      %c0_18 = arith.constant 0 : index
      %c0_19 = arith.constant 0 : index
      %19 = vector.load %arg7[%c0_17, %c0_18, %c0_19] : memref<1x1x128xf32, #tpu.memory_space<vmem>>, vector<1x1x128xf32>
      %20 = vector.shape_cast %19 : vector<1x1x128xf32> to vector<1x128xf32>
      %21 = vector.broadcast %20 : vector<1x128xf32> to vector<256x128xf32>
      %22 = arith.addf %18, %21 : vector<256x128xf32>
      %cst_20 = arith.constant 0.000000e+00 : f32
      %23 = vector.broadcast %cst_20 : f32 to vector<256x128xf32>
      %24 = arith.maximumf %22, %23 : vector<256x128xf32>
      %c0_21 = arith.constant 0 : index
      %c0_22 = arith.constant 0 : index
      %c0_23 = arith.constant 0 : index
      %25 = vector.load %arg8[%c0_21, %c0_22, %c0_23] : memref<1x256x128xf32, #tpu.memory_space<vmem>>, vector<1x256x128xf32>
      %26 = vector.shape_cast %25 : vector<1x256x128xf32> to vector<256x128xf32>
      %27 = vector.shape_cast %24 : vector<256x128xf32> to vector<1x256x128xf32>
      tpu.vector_store %arg8[%c0_21, %c0_22, %c0_23], %27 {strides = array<i32>} : memref<1x256x128xf32, #tpu.memory_space<vmem>>, vector<1x256x128xf32>,
    } else {
    }
    return
  }
  func.func @transform_0(%arg0: i32, %arg1: i32, %arg2: i32, %arg3: i32) -> (i32, i32, i32) {
    %c0_i32 = arith.constant 0 : i32
    return %arg0, %arg1, %arg3 : i32, i32, i32
  }
  func.func @transform_1(%arg0: i32, %arg1: i32, %arg2: i32, %arg3: i32) -> (i32, i32, i32) {
    %c0_i32 = arith.constant 0 : i32
    return %arg0, %arg3, %arg2 : i32, i32, i32
  }
  func.func @transform_2(%arg0: i32, %arg1: i32, %arg2: i32, %arg3: i32) -> (i32, i32, i32) {
    %c0_i32 = arith.constant 0 : i32
    %c0_i32_0 = arith.constant 0 : i32
    return %arg0, %c0_i32, %arg2 : i32, i32, i32
  }
  func.func @transform_3(%arg0: i32, %arg1: i32, %arg2: i32, %arg3: i32) -> (i32, i32, i32) {
    %c0_i32 = arith.constant 0 : i32
    %c0_i32_0 = arith.constant 0 : i32
    return %arg0, %c0_i32, %arg2 : i32, i32, i32
  }
  func.func @transform_4(%arg0: i32, %arg1: i32, %arg2: i32, %arg3: i32) -> (i32, i32, i32) {
    %c0_i32 = arith.constant 0 : i32
    return %arg0, %arg1, %arg2 : i32, i32, i32
  }
}

</mosaic_0001>

<llo_original>
// kernel: tpu_custom_call.1
$region0: #{tpu_custom_call.1}
  #allocation0 [shape = 'u32[]', space=smem, size = 0x4, offset = 0x4, fixed_abs, tag = 'smem constant byte address 0x4 - core index']
  #allocation1 [shape = 'u32[144,128]{1,0:T(1,128)}', space=vmem, size = 0x12000, scoped, tag = 'internal scratch']
  #allocation2 [shape = 'f32[256,128]{1,0:T(8,128)}', space=vmem, size = 0x20000, scoped, tag = 'scratch operand']
  %s0 = inlined_call_operand.vmem [shape: bf16[1,1024,152], index: 0, kind: input, shape index: {}]
  %s1 = inlined_call_operand.vmem [shape: bf16[1,152,128], index: 1, kind: input, shape index: {}]
  %s2 = inlined_call_operand.vmem [shape: f32[1,1,128], index: 2, kind: input, shape index: {}]
  %s3 = inlined_call_operand.vmem [shape: f32[1,1,128], index: 3, kind: input, shape index: {}]
  %s4 = inlined_call_operand.hbm [shape: f32[1,1024,128], index: 4, kind: output, shape index: {}]
  %s5 = sld [smem:[#allocation0]]
  $region57: #{tpu_custom_call.1} parent=0
    _
  %s7 = ssub.s32 1, %s5
  %s8 = scalar_select 0, %s7, %s5
  $region1: #{tpu_custom_call.1} parent=0
    #allocation3 [shape = 'u8[262144]{0}', space=vmem, size = 0x40000, scoped, tag = 'output window, operand 0']
    #allocation4 [shape = 's32[2]{0}', space=sflag, size = 0x8, scoped, tag = 'scoped memory for tpu_custom_call.1']
    %9 = vsyncpa [#allocation4], 0
    %s10 = scalar_lea.sflag [#allocation4], 1
    %11 = vsyncpa %s10, 0
    loop: start=0, step=1, limit=6
    $region2: #{tpu_custom_call.1} parent=1 // loop_pre_header
      _
    $region3: #{tpu_custom_call.1} parent=1 // loop_header
      %s13 = sphi 0, %s17
      %p14 = scmp.ge.s32.totalorder %s13, 6
      %s20 = sphi 0, %s46
      %s21 = sphi 0, %s42
      %s22 = sphi 0, %s38
      %s23 = sphi 0, %s34
      %s24 = sphi 0, %s20
      %s25 = sphi 0, %s21
      %s26 = sphi 0, %s22
      %s27 = sphi 0, %s23
      %s28 = sphi 0, %s24
      %s29 = sphi 0, %s25
      %s30 = sphi 0, %s26
      %s31 = sphi 0, %s27
      %s53 = sphi 0, %s55
      %s56 = sphi 0, %s53
      %s57 = sphi 0, %s56
      %s73 = sphi 0, %s57
      %s83 = sphi 0, %s85
      %s86 = sphi 0, %s83
      %s87 = sphi 0, %s86
      %s103 = sphi 0, %s87
      %s111 = sphi 0, %s113
      %s114 = sphi 0, %s111
      %s115 = sphi 0, %s114
      %s131 = sphi 0, %s115
      %s139 = sphi 0, %s141
      %s142 = sphi 0, %s139
      %s143 = sphi 0, %s142
      %s159 = sphi 0, %s143
      %s169 = sphi 0, %s171
      %s172 = sphi 0, %s169
      %s173 = sphi 0, %s172
      %s189 = sphi 0, %s173
    $region4: #{tpu_custom_call.1} parent=1 // loop_header_branch
      %16 = sbr.rel (%p14) target = $region8
    $region5: #{tpu_custom_call.1} parent=1 // loop_body
      %s18 = ssub.s32 %s13, 1
      %s19 = ssub.s32 %s13, 2
      %s32 = sadd.s32 1, %s23
      %p33 = scmp.ge.s32.totalorder %s32, 1
      %s34 = scalar_select %p33, 0, %s32
      %s35 = sadd.s32 1, %s22
      %s36 = scalar_select %p33, %s35, %s22
      %p37 = scmp.ge.s32.totalorder %s36, 1
      %s38 = scalar_select %p37, 0, %s36
      %s39 = sadd.s32 1, %s21
      %s40 = scalar_select %p37, %s39, %s21
      %p41 = scmp.ge.s32.totalorder %s40, 4
      %s42 = scalar_select %p41, 0, %s40
      %s43 = sadd.s32 1, %s20
      %s44 = scalar_select %p41, %s43, %s20
      %p45 = scmp.ge.s32.totalorder %s44, 1
      %s46 = scalar_select %p45, 0, %s44
      %s47 = ssub.s32 %s20, %s46
      %s48 = ssub.s32 %s21, %s42
      %s49 = sor.u32 %s47, %s48
      %s50 = ssub.s32 %s23, %s34
      %s51 = sor.u32 %s49, %s50
      %p52 = scmp.eq.s32.totalorder %s51, 0
      %s54 = sadd.s32 %s53, 1
      %s55 = scalar_select %p52, %s53, %s54
      %p58 = pneg %p52
      %p59 = scmp.eq.s32.totalorder %s13, 3
      %p60 = por %p58, %p59
      %p61 = scmp.ne.s32.totalorder %s53, %s56
      %p62 = scmp.eq.s32.totalorder %s13, 0
      %p63 = por %p61, %p62
      %p64 = scmp.ne.s32.totalorder %s53, %s56
      %p65 = scmp.eq.s32.totalorder %s18, 3
      %p66 = por %p64, %p65
      %p67 = scmp.ne.s32.totalorder %s56, %s57
      %p68 = scmp.eq.s32.totalorder %s18, 0
      %p69 = por %p67, %p68
      %p70 = scmp.ne.s32.totalorder %s56, %s57
      %p71 = scmp.eq.s32.totalorder %s19, 3
      %p72 = por %p70, %p71
      %p74 = scmp.ne.s32.totalorder %s57, %s73
      %p75 = scmp.eq.s32.totalorder %s19, 0
      %p76 = por %p74, %p75
      %s77 = ssub.s32 %s20, %s46
      %s78 = ssub.s32 %s23, %s34
      %s79 = sor.u32 %s77, %s78
      %s80 = ssub.s32 %s22, %s38
      %s81 = sor.u32 %s79, %s80
      %p82 = scmp.eq.s32.totalorder %s81, 0
      %s84 = sadd.s32 %s83, 1
      %s85 = scalar_select %p82, %s83, %s84
      %p88 = pneg %p82
      %p89 = scmp.eq.s32.totalorder %s13, 3
      %p90 = por %p88, %p89
      %p91 = scmp.ne.s32.totalorder %s83, %s86
      %p92 = scmp.eq.s32.totalorder %s13, 0
      %p93 = por %p91, %p92
      %p94 = scmp.ne.s32.totalorder %s83, %s86
      %p95 = scmp.eq.s32.totalorder %s18, 3
      %p96 = por %p94, %p95
      %p97 = scmp.ne.s32.totalorder %s86, %s87
      %p98 = scmp.eq.s32.totalorder %s18, 0
      %p99 = por %p97, %p98
      %p100 = scmp.ne.s32.totalorder %s86, %s87
      %p101 = scmp.eq.s32.totalorder %s19, 3
      %p102 = por %p100, %p101
      %p104 = scmp.ne.s32.totalorder %s87, %s103
      %p105 = scmp.eq.s32.totalorder %s19, 0
      %p106 = por %p104, %p105
      %s107 = ssub.s32 %s20, %s46
      %s108 = ssub.s32 %s22, %s38
      %s109 = sor.u32 %s107, %s108
      %p110 = scmp.eq.s32.totalorder %s109, 0
      %s112 = sadd.s32 %s111, 1
      %s113 = scalar_select %p110, %s111, %s112
      %p116 = pneg %p110
      %p117 = scmp.eq.s32.totalorder %s13, 3
      %p118 = por %p116, %p117
      %p119 = scmp.ne.s32.totalorder %s111, %s114
      %p120 = scmp.eq.s32.totalorder %s13, 0
      %p121 = por %p119, %p120
      %p122 = scmp.ne.s32.totalorder %s111, %s114
      %p123 = scmp.eq.s32.totalorder %s18, 3
      %p124 = por %p122, %p123
      %p125 = scmp.ne.s32.totalorder %s114, %s115
      %p126 = scmp.eq.s32.totalorder %s18, 0
      %p127 = por %p125, %p126
      %p128 = scmp.ne.s32.totalorder %s114, %s115
      %p129 = scmp.eq.s32.totalorder %s19, 3
      %p130 = por %p128, %p129
      %p132 = scmp.ne.s32.totalorder %s115, %s131
      %p133 = scmp.eq.s32.totalorder %s19, 0
      %p134 = por %p132, %p133
      %s135 = ssub.s32 %s20, %s46
      %s136 = ssub.s32 %s22, %s38
      %s137 = sor.u32 %s135, %s136
      %p138 = scmp.eq.s32.totalorder %s137, 0
      %s140 = sadd.s32 %s139, 1
      %s141 = scalar_select %p138, %s139, %s140
      %p144 = pneg %p138
      %p145 = scmp.eq.s32.totalorder %s13, 3
      %p146 = por %p144, %p145
      %p147 = scmp.ne.s32.totalorder %s139, %s142
      %p148 = scmp.eq.s32.totalorder %s13, 0
      %p149 = por %p147, %p148
      %p150 = scmp.ne.s32.totalorder %s139, %s142
      %p151 = scmp.eq.s32.totalorder %s18, 3
      %p152 = por %p150, %p151
      %p153 = scmp.ne.s32.totalorder %s142, %s143
      %p154 = scmp.eq.s32.totalorder %s18, 0
      %p155 = por %p153, %p154
      %p156 = scmp.ne.s32.totalorder %s142, %s143
      %p157 = scmp.eq.s32.totalorder %s19, 3
      %p158 = por %p156, %p157
      %p160 = scmp.ne.s32.totalorder %s143, %s159
      %p161 = scmp.eq.s32.totalorder %s19, 0
      %p162 = por %p160, %p161
      %s163 = ssub.s32 %s20, %s46
      %s164 = ssub.s32 %s21, %s42
      %s165 = sor.u32 %s163, %s164
      %s166 = ssub.s32 %s22, %s38
      %s167 = sor.u32 %s165, %s166
      %p168 = scmp.eq.s32.totalorder %s167, 0
      %s170 = sadd.s32 %s169, 1
      %s171 = scalar_select %p168, %s169, %s170
      %p174 = pneg %p168
      %p175 = scmp.eq.s32.totalorder %s13, 3
      %p176 = por %p174, %p175
      %p177 = scmp.ne.s32.totalorder %s169, %s172
      %p178 = scmp.eq.s32.totalorder %s13, 0
      %p179 = por %p177, %p178
      %p180 = scmp.ne.s32.totalorder %s169, %s172
      %p181 = scmp.eq.s32.totalorder %s18, 3
      %p182 = por %p180, %p181
      %p183 = scmp.ne.s32.totalorder %s172, %s173
      %p184 = scmp.eq.s32.totalorder %s18, 0
      %p185 = por %p183, %p184
      %p186 = scmp.ne.s32.totalorder %s172, %s173
      %p187 = scmp.eq.s32.totalorder %s19, 3
      %p188 = por %p186, %p187
      %p190 = scmp.ne.s32.totalorder %s173, %s189
      %p191 = scmp.eq.s32.totalorder %s19, 0
      %p192 = por %p190, %p191
      %p193 = scmp.le.s32.totalorder 1, %s13
      %p194 = scmp.lt.s32.totalorder %s13, 5
      %p195 = pnand %p193, %p194
      %p196 = pneg %p195
      // Predicated region
      $region9: #{tpu_custom_call.1} parent=5 // pred_check
        _
      $region10: #{tpu_custom_call.1} parent=5 // pred_check_branch
        %198 = sbr.rel (%p195) target = $region12
      $region11: #{tpu_custom_call.1} parent=5 // pred_region
        %s199 = ssub.s32 %s13, 1
        // Predicated region
        $region13: #{tpu_custom_call.1} parent=11 // pred_check
          %p200 = pneg %p99
        $region14: #{tpu_custom_call.1} parent=11 // pred_check_branch
          %202 = sbr.rel (%p200) target = $region16
        $region15: #{tpu_custom_call.1} parent=11 // pred_region
          %s203 = smul.u32 19, %s27
          %p204 = scmp.lt.s32.totalorder %s24, 0
          %s205 = scalar_select %p204, %s24, 0
          %p206 = scmp.lt.s32.totalorder %s203, 18
          %s207 = scalar_select %p206, %s203, 18
          %p208 = scmp.lt.s32.totalorder %s26, 0
          %s209 = scalar_select %p208, %s26, 0
          %s210 = sadd.s32 %s209, %s207
          %s211 = smul.addr %s205, 19
          %s212 = sadd.s32 %s210, %s211
          %s213 = smul.addr %s212, 4
          %s214 = scalar_lea.vmem %s1, %s213
          %s215 = smul.u32 19, %s27
        $region16: #{tpu_custom_call.1} parent=11 // pred_fallthru
          _
        // Predicated region
        $region17: #{tpu_custom_call.1} parent=11 // pred_check
          %p216 = pneg %p127
        $region18: #{tpu_custom_call.1} parent=11 // pred_check_branch
          %218 = sbr.rel (%p216) target = $region20
        $region19: #{tpu_custom_call.1} parent=11 // pred_region
          %p219 = scmp.lt.s32.totalorder %s24, 0
          %s220 = scalar_select %p219, %s24, 0
          %p221 = scmp.lt.s32.totalorder %s26, 0
          %s222 = scalar_select %p221, %s26, 0
          %s223 = sadd.s32 %s222, %s220
          %s224 = scalar_lea.vmem %s2, %s223
        $region20: #{tpu_custom_call.1} parent=11 // pred_fallthru
          _
        // Predicated region
        $region21: #{tpu_custom_call.1} parent=11 // pred_check
          %p225 = pneg %p155
        $region22: #{tpu_custom_call.1} parent=11 // pred_check_branch
          %227 = sbr.rel (%p225) target = $region24
        $region23: #{tpu_custom_call.1} parent=11 // pred_region
          %p228 = scmp.lt.s32.totalorder %s24, 0
          %s229 = scalar_select %p228, %s24, 0
          %p230 = scmp.lt.s32.totalorder %s26, 0
          %s231 = scalar_select %p230, %s26, 0
          %s232 = sadd.s32 %s231, %s229
          %s233 = scalar_lea.vmem %s3, %s232
        $region24: #{tpu_custom_call.1} parent=11 // pred_fallthru
          _
      $region12: #{tpu_custom_call.1} parent=5 // pred_fallthru
        _
      %p234 = scmp.lt.s32.totalorder %s13, 4
      // Predicated region
      $region25: #{tpu_custom_call.1} parent=5 // pred_check
        %p235 = pneg %p234
      $region26: #{tpu_custom_call.1} parent=5 // pred_check_branch
        %237 = sbr.rel (%p235) target = $region28
      $region27: #{tpu_custom_call.1} parent=5 // pred_region
        // Predicated region
        $region29: #{tpu_custom_call.1} parent=27 // pred_check
          %p238 = pneg %p63
        $region30: #{tpu_custom_call.1} parent=27 // pred_check_branch
          %240 = sbr.rel (%p238) target = $region32
        $region31: #{tpu_custom_call.1} parent=27 // pred_region
          %s241 = smul.u32 32, %s21
          %s242 = smul.u32 2, %s23
          %p243 = scmp.lt.s32.totalorder %s20, 0
          %s244 = scalar_select %p243, %s20, 0
          %p245 = scmp.lt.s32.totalorder %s241, 127
          %s246 = scalar_select %p245, %s241, 127
          %p247 = scmp.lt.s32.totalorder %s242, 1
          %s248 = scalar_select %p247, %s242, 1
          %s249 = smul.addr %s246, 2
          %s250 = sadd.s32 %s248, %s249
          %s251 = smul.addr %s244, 256
          %s252 = sadd.s32 %s250, %s251
          %s253 = smul.addr %s252, 4
          %s254 = scalar_lea.vmem %s0, %s253
          %s255 = smul.u32 32, %s21
          %s256 = smul.u32 2, %s23
        $region32: #{tpu_custom_call.1} parent=27 // pred_fallthru
          _
      $region28: #{tpu_custom_call.1} parent=5 // pred_fallthru
        _
      %p257 = scmp.le.s32.totalorder 1, %s13
      %p258 = scmp.lt.s32.totalorder %s13, 5
      %p259 = pnand %p257, %p258
      %p260 = pneg %p259
      // Predicated region
      $region33: #{tpu_custom_call.1} parent=5 // pred_check
        _
      $region34: #{tpu_custom_call.1} parent=5 // pred_check_branch
        %262 = sbr.rel (%p259) target = $region36
      $region35: #{tpu_custom_call.1} parent=5 // pred_region
        %s263 = ssub.s32 %s13, 1
        %s264 = smul.u32 32, %s25
        %s265 = smul.u32 2, %s27
        %p266 = scmp.lt.s32.totalorder %s24, 0
        %s267 = scalar_select %p266, %s24, 0
        %p268 = scmp.lt.s32.totalorder %s264, 127
        %s269 = scalar_select %p268, %s264, 127
        %p270 = scmp.lt.s32.totalorder %s265, 1
        %s271 = scalar_select %p270, %s265, 1
        %s272 = smul.addr %s269, 2
        %s273 = sadd.s32 %s271, %s272
        %s274 = smul.addr %s267, 256
        %s275 = sadd.s32 %s273, %s274
        %s276 = smul.addr %s275, 4
        %s277 = scalar_lea.vmem %s0, %s276
        %p278 = pneg %p69
        %p279 = pneg %p66
        %s280 = smul.u32 19, %s27
        %p281 = scmp.lt.s32.totalorder %s24, 0
        %s282 = scalar_select %p281, %s24, 0
        %p283 = scmp.lt.s32.totalorder %s280, 18
        %s284 = scalar_select %p283, %s280, 18
        %p285 = scmp.lt.s32.totalorder %s26, 0
        %s286 = scalar_select %p285, %s26, 0
        %s287 = sadd.s32 %s286, %s284
        %s288 = smul.addr %s282, 19
        %s289 = sadd.s32 %s287, %s288
        %s290 = smul.addr %s289, 4
        %s291 = scalar_lea.vmem %s1, %s290
        %p292 = pneg %p99
        %p293 = pneg %p96
        %p294 = scmp.lt.s32.totalorder %s24, 0
        %s295 = scalar_select %p294, %s24, 0
        %p296 = scmp.lt.s32.totalorder %s26, 0
        %s297 = scalar_select %p296, %s26, 0
        %s298 = sadd.s32 %s297, %s295
        %s299 = scalar_lea.vmem %s2, %s298
        %p300 = pneg %p127
        %p301 = pneg %p124
        %p302 = scmp.lt.s32.totalorder %s24, 0
        %s303 = scalar_select %p302, %s24, 0
        %p304 = scmp.lt.s32.totalorder %s26, 0
        %s305 = scalar_select %p304, %s26, 0
        %s306 = sadd.s32 %s305, %s303
        %s307 = scalar_lea.vmem %s3, %s306
        %p308 = pneg %p155
        %p309 = pneg %p152
        %p310 = pneg %p185
        %p311 = pneg %p182
        %s312 = sand.u32 %s172, 1
        %s313 = scalar_lea.sflag [#allocation4], %s312
        %s314 = sand.u32 %s172, 1
        %s315 = smul.addr %s314, 256
        %s316 = scalar_lea.vmem [#allocation3], %s315
        %s317 = smul.u32 32, %s25
        %s318 = smul.u32 2, %s27
        %p319 = scmp.lt.s32.totalorder %s24, 0
        %s320 = scalar_select %p319, %s24, 0
        %p321 = scmp.lt.s32.totalorder %s317, 127
        %s322 = scalar_select %p321, %s317, 127
        %p323 = scmp.lt.s32.totalorder %s318, 1
        %s324 = scalar_select %p323, %s318, 1
        %s325 = smul.addr %s322, 2
        %s326 = sadd.s32 %s324, %s325
        %s327 = smul.addr %s320, 256
        %s328 = sadd.s32 %s326, %s327
        %s329 = smul.addr %s328, 4
        %s330 = scalar_lea.vmem %s0, %s329
        %s331 = smul.u32 32, %s25
        %s332 = smul.u32 2, %s27
        %s333 = smul.u32 19, %s27
        %p334 = scmp.lt.s32.totalorder %s24, 0
        %s335 = scalar_select %p334, %s24, 0
        %p336 = scmp.lt.s32.totalorder %s333, 18
        %s337 = scalar_select %p336, %s333, 18
        %p338 = scmp.lt.s32.totalorder %s26, 0
        %s339 = scalar_select %p338, %s26, 0
        %s340 = sadd.s32 %s339, %s337
        %s341 = smul.addr %s335, 19
        %s342 = sadd.s32 %s340, %s341
        %s343 = smul.addr %s342, 4
        %s344 = scalar_lea.vmem %s1, %s343
        %s345 = smul.u32 19, %s27
        %p346 = scmp.lt.s32.totalorder %s24, 0
        %s347 = scalar_select %p346, %s24, 0
        %p348 = scmp.lt.s32.totalorder %s26, 0
        %s349 = scalar_select %p348, %s26, 0
        %s350 = sadd.s32 %s349, %s347
        %s351 = scalar_lea.vmem %s2, %s350
        %p352 = scmp.lt.s32.totalorder %s24, 0
        %s353 = scalar_select %p352, %s24, 0
        %p354 = scmp.lt.s32.totalorder %s26, 0
        %s355 = scalar_select %p354, %s26, 0
        %s356 = sadd.s32 %s355, %s353
        %s357 = scalar_lea.vmem %s3, %s356
        %s358 = smul.u32 32, %s25
        %p360 = scmp.eq.s32.totalorder %s27, 0
        // Predicated region
        $region37: #{tpu_custom_call.1} parent=35 // pred_check
          %p361 = pneg %p360
        $region38: #{tpu_custom_call.1} parent=35 // pred_check_branch
          %363 = sbr.rel (%p361) target = $region40
        $region39: #{tpu_custom_call.1} parent=35 // pred_region
          %364 = vst [vmem:[#allocation2] sm:$0xff] 0.0
          %365 = vst [vmem:[#allocation2 + $0x8] sm:$0xff] 0.0
          %366 = vst [vmem:[#allocation2 + $0x10] sm:$0xff] 0.0
          %367 = vst [vmem:[#allocation2 + $0x18] sm:$0xff] 0.0
          %368 = vst [vmem:[#allocation2 + $0x20] sm:$0xff] 0.0
          %369 = vst [vmem:[#allocation2 + $0x28] sm:$0xff] 0.0
          %370 = vst [vmem:[#allocation2 + $0x30] sm:$0xff] 0.0
          %371 = vst [vmem:[#allocation2 + $0x38] sm:$0xff] 0.0
          %372 = vst [vmem:[#allocation2 + $0x40] sm:$0xff] 0.0
          %373 = vst [vmem:[#allocation2 + $0x48] sm:$0xff] 0.0
          %374 = vst [vmem:[#allocation2 + $0x50] sm:$0xff] 0.0
          %375 = vst [vmem:[#allocation2 + $0x58] sm:$0xff] 0.0
          %376 = vst [vmem:[#allocation2 + $0x60] sm:$0xff] 0.0
          %377 = vst [vmem:[#allocation2 + $0x68] sm:$0xff] 0.0
          %378 = vst [vmem:[#allocation2 + $0x70] sm:$0xff] 0.0
          %379 = vst [vmem:[#allocation2 + $0x78] sm:$0xff] 0.0
          %380 = vst [vmem:[#allocation2 + $0x80] sm:$0xff] 0.0
          %381 = vst [vmem:[#allocation2 + $0x88] sm:$0xff] 0.0
          %382 = vst [vmem:[#allocation2 + $0x90] sm:$0xff] 0.0
          %383 = vst [vmem:[#allocation2 + $0x98] sm:$0xff] 0.0
          %384 = vst [vmem:[#allocation2 + $0xa0] sm:$0xff] 0.0
          %385 = vst [vmem:[#allocation2 + $0xa8] sm:$0xff] 0.0
          %386 = vst [vmem:[#allocation2 + $0xb0] sm:$0xff] 0.0
          %387 = vst [vmem:[#allocation2 + $0xb8] sm:$0xff] 0.0
          %388 = vst [vmem:[#allocation2 + $0xc0] sm:$0xff] 0.0
          %389 = vst [vmem:[#allocation2 + $0xc8] sm:$0xff] 0.0
          %390 = vst [vmem:[#allocation2 + $0xd0] sm:$0xff] 0.0
          %391 = vst [vmem:[#allocation2 + $0xd8] sm:$0xff] 0.0
          %392 = vst [vmem:[#allocation2 + $0xe0] sm:$0xff] 0.0
          %393 = vst [vmem:[#allocation2 + $0xe8] sm:$0xff] 0.0
          %394 = vst [vmem:[#allocation2 + $0xf0] sm:$0xff] 0.0
          %395 = vst [vmem:[#allocation2 + $0xf8] sm:$0xff] 0.0
        $region40: #{tpu_custom_call.1} parent=35 // pred_fallthru
          _
        %v396 = vld [vmem:[#allocation2] sm:$0xff]
        %v397 = vld [vmem:[#allocation2 + $0x8] sm:$0xff]
        %v398 = vld [vmem:[#allocation2 + $0x10] sm:$0xff]
        %v399 = vld [vmem:[#allocation2 + $0x18] sm:$0xff]
        %v400 = vld [vmem:[#allocation2 + $0x20] sm:$0xff]
        %v401 = vld [vmem:[#allocation2 + $0x28] sm:$0xff]
        %v402 = vld [vmem:[#allocation2 + $0x30] sm:$0xff]
        %v403 = vld [vmem:[#allocation2 + $0x38] sm:$0xff]
        %v404 = vld [vmem:[#allocation2 + $0x40] sm:$0xff]
        %v405 = vld [vmem:[#allocation2 + $0x48] sm:$0xff]
        %v406 = vld [vmem:[#allocation2 + $0x50] sm:$0xff]
        %v407 = vld [vmem:[#allocation2 + $0x58] sm:$0xff]
        %v408 = vld [vmem:[#allocation2 + $0x60] sm:$0xff]
        %v409 = vld [vmem:[#allocation2 + $0x68] sm:$0xff]
        %v410 = vld [vmem:[#allocation2 + $0x70] sm:$0xff]
        %v411 = vld [vmem:[#allocation2 + $0x78] sm:$0xff]
        %v412 = vld [vmem:[#allocation2 + $0x80] sm:$0xff]
        %v413 = vld [vmem:[#allocation2 + $0x88] sm:$0xff]
        %v414 = vld [vmem:[#allocation2 + $0x90] sm:$0xff]
        %v415 = vld [vmem:[#allocation2 + $0x98] sm:$0xff]
        %v416 = vld [vmem:[#allocation2 + $0xa0] sm:$0xff]
        %v417 = vld [vmem:[#allocation2 + $0xa8] sm:$0xff]
        %v418 = vld [vmem:[#allocation2 + $0xb0] sm:$0xff]
        %v419 = vld [vmem:[#allocation2 + $0xb8] sm:$0xff]
        %v420 = vld [vmem:[#allocation2 + $0xc0] sm:$0xff]
        %v421 = vld [vmem:[#allocation2 + $0xc8] sm:$0xff]
        %v422 = vld [vmem:[#allocation2 + $0xd0] sm:$0xff]
        %v423 = vld [vmem:[#allocation2 + $0xd8] sm:$0xff]
        %v424 = vld [vmem:[#allocation2 + $0xe0] sm:$0xff]
        %v425 = vld [vmem:[#allocation2 + $0xe8] sm:$0xff]
        %v426 = vld [vmem:[#allocation2 + $0xf0] sm:$0xff]
        %v427 = vld [vmem:[#allocation2 + $0xf8] sm:$0xff]
        %v428 = vld [vmem:[%s330] sm:$0xff]
        %v429 = vld [vmem:[%s330 + $0x8] sm:$0xff]
        %v430 = vld [vmem:[%s330 + $0x10] sm:$0xff]
        %v431 = vld [vmem:[%s330 + $0x18] sm:$0xff]
        %v432 = vld [vmem:[%s330 + $0x20] sm:$0xff]
        %v433 = vld [vmem:[%s330 + $0x28] sm:$0xff]
        %v434 = vld [vmem:[%s330 + $0x30] sm:$0xff]
        %v435 = vld [vmem:[%s330 + $0x38] sm:$0xff]
        %v436 = vld [vmem:[%s330 + $0x40] sm:$0xff]
        %v437 = vld [vmem:[%s330 + $0x48] sm:$0xff]
        %v438 = vld [vmem:[%s330 + $0x50] sm:$0xff]
        %v439 = vld [vmem:[%s330 + $0x58] sm:$0xff]
        %v440 = vld [vmem:[%s330 + $0x60] sm:$0xff]
        %v441 = vld [vmem:[%s330 + $0x68] sm:$0xff]
        %v442 = vld [vmem:[%s330 + $0x70] sm:$0xff]
        %v443 = vld [vmem:[%s330 + $0x78] sm:$0xff]
        %v444 = vld [vmem:[%s330 + $0x80] sm:$0xff]
        %v445 = vld [vmem:[%s330 + $0x88] sm:$0xff]
        %v446 = vld [vmem:[%s330 + $0x90] sm:$0xff]
        %v447 = vld [vmem:[%s330 + $0x98] sm:$0xff]
        %v448 = vld [vmem:[%s330 + $0xa0] sm:$0xff]
        %v449 = vld [vmem:[%s330 + $0xa8] sm:$0xff]
        %v450 = vld [vmem:[%s330 + $0xb0] sm:$0xff]
        %v451 = vld [vmem:[%s330 + $0xb8] sm:$0xff]
        %v452 = vld [vmem:[%s330 + $0xc0] sm:$0xff]
        %v453 = vld [vmem:[%s330 + $0xc8] sm:$0xff]
        %v454 = vld [vmem:[%s330 + $0xd0] sm:$0xff]
        %v455 = vld [vmem:[%s330 + $0xd8] sm:$0xff]
        %v456 = vld [vmem:[%s330 + $0xe0] sm:$0xff]
        %v457 = vld [vmem:[%s330 + $0xe8] sm:$0xff]
        %v458 = vld [vmem:[%s330 + $0xf0] sm:$0xff]
        %v459 = vld [vmem:[%s330 + $0xf8] sm:$0xff]
        %v460 = vld [vmem:[%s344] sm:$0xf]
        %v461 = vld [vmem:[%s344 + $0x4] sm:$0xf]
        %v462 = vld [vmem:[%s344 + $0x8] sm:$0xf]
        %v463 = vld [vmem:[%s344 + $0xc] sm:$0xf]
        %v464 = vld [vmem:[%s344 + $0x10] sm:$0xf]
        %v465 = vld [vmem:[%s344 + $0x14] sm:$0xf]
        %v466 = vld [vmem:[%s344 + $0x18] sm:$0xf]
        %v467 = vld [vmem:[%s344 + $0x1c] sm:$0xf]
        %v468 = vld [vmem:[%s344 + $0x20] sm:$0xf]
        %v469 = vld [vmem:[%s344 + $0x24] sm:$0xf]
        %v470 = vld [vmem:[%s344 + $0x28] sm:$0xf]
        %v471 = vld [vmem:[%s344 + $0x2c] sm:$0xf]
        %v472 = vld [vmem:[%s344 + $0x30] sm:$0xf]
        %v473 = vld [vmem:[%s344 + $0x34] sm:$0xf]
        %v474 = vld [vmem:[%s344 + $0x38] sm:$0xf]
        %v475 = vld [vmem:[%s344 + $0x3c] sm:$0xf]
        %v476 = vld [vmem:[%s344 + $0x40] sm:$0xf]
        %v477 = vld [vmem:[%s344 + $0x44] sm:$0xf]
        %v478 = vld [vmem:[%s344 + $0x48] sm:$0xf]
        %v511 = vunpack.c.l.b16 %v428
        %v512 = vunpack.c.h.b16 %v428
        %v513 = vunpack.c.l.b16 %v429
        %v514 = vunpack.c.h.b16 %v429
        %v515 = vunpack.c.l.b16 %v430
        %v516 = vunpack.c.h.b16 %v430
        %v517 = vunpack.c.l.b16 %v431
        %v518 = vunpack.c.h.b16 %v431
        %v519 = vunpack.c.l.b16 %v432
        %v520 = vunpack.c.h.b16 %v432
        %v521 = vunpack.c.l.b16 %v433
        %v522 = vunpack.c.h.b16 %v433
        %v523 = vunpack.c.l.b16 %v434
        %v524 = vunpack.c.h.b16 %v434
        %v525 = vunpack.c.l.b16 %v435
        %v526 = vunpack.c.h.b16 %v435
        %v527 = vunpack.c.l.b16 %v436
        %v528 = vunpack.c.h.b16 %v436
        %v529 = vunpack.c.l.b16 %v437
        %v530 = vunpack.c.h.b16 %v437
        %v531 = vunpack.c.l.b16 %v438
        %v532 = vunpack.c.h.b16 %v438
        %v533 = vunpack.c.l.b16 %v439
        %v534 = vunpack.c.h.b16 %v439
        %v535 = vunpack.c.l.b16 %v440
        %v536 = vunpack.c.h.b16 %v440
        %v537 = vunpack.c.l.b16 %v441
        %v538 = vunpack.c.h.b16 %v441
        %v539 = vunpack.c.l.b16 %v442
        %v540 = vunpack.c.h.b16 %v442
        %v541 = vunpack.c.l.b16 %v443
        %v542 = vunpack.c.h.b16 %v443
        %v543 = vunpack.c.l.b16 %v444
        %v544 = vunpack.c.h.b16 %v444
        %v545 = vunpack.c.l.b16 %v445
        %v546 = vunpack.c.h.b16 %v445
        %v547 = vunpack.c.l.b16 %v446
        %v548 = vunpack.c.h.b16 %v446
        %v549 = vunpack.c.l.b16 %v447
        %v550 = vunpack.c.h.b16 %v447
        %v551 = vunpack.c.l.b16 %v448
        %v552 = vunpack.c.h.b16 %v448
        %v553 = vunpack.c.l.b16 %v449
        %v554 = vunpack.c.h.b16 %v449
        %v555 = vunpack.c.l.b16 %v450
        %v556 = vunpack.c.h.b16 %v450
        %v557 = vunpack.c.l.b16 %v451
        %v558 = vunpack.c.h.b16 %v451
        %v559 = vunpack.c.l.b16 %v452
        %v560 = vunpack.c.h.b16 %v452
        %v561 = vunpack.c.l.b16 %v453
        %v562 = vunpack.c.h.b16 %v453
        %v563 = vunpack.c.l.b16 %v454
        %v564 = vunpack.c.h.b16 %v454
        %v565 = vunpack.c.l.b16 %v455
        %v566 = vunpack.c.h.b16 %v455
        %v567 = vunpack.c.l.b16 %v456
        %v568 = vunpack.c.h.b16 %v456
        %v569 = vunpack.c.l.b16 %v457
        %v570 = vunpack.c.h.b16 %v457
        %v571 = vunpack.c.l.b16 %v458
        %v572 = vunpack.c.h.b16 %v458
        %v573 = vunpack.c.l.b16 %v459
        %v574 = vunpack.c.h.b16 %v459
        %v575 = vpack.c.b16 %v513, %v511
        %v576 = vpack.c.b16 %v514, %v512
        %v577 = vpack.c.b16 %v517, %v515
        %v578 = vpack.c.b16 %v518, %v516
        %v579 = vpack.c.b16 %v521, %v519
        %v580 = vpack.c.b16 %v522, %v520
        %v581 = vpack.c.b16 %v525, %v523
        %v582 = vpack.c.b16 %v526, %v524
        %v583 = vpack.c.b16 %v529, %v527
        %v584 = vpack.c.b16 %v530, %v528
        %v585 = vpack.c.b16 %v533, %v531
        %v586 = vpack.c.b16 %v534, %v532
        %v587 = vpack.c.b16 %v537, %v535
        %v588 = vpack.c.b16 %v538, %v536
        %v589 = vpack.c.b16 %v541, %v539
        %v590 = vpack.c.b16 %v542, %v540
        %v591 = vpack.c.b16 %v545, %v543
        %v592 = vpack.c.b16 %v546, %v544
        %v593 = vpack.c.b16 %v549, %v547
        %v594 = vpack.c.b16 %v550, %v548
        %v595 = vpack.c.b16 %v553, %v551
        %v596 = vpack.c.b16 %v554, %v552
        %v597 = vpack.c.b16 %v557, %v555
        %v598 = vpack.c.b16 %v558, %v556
        %v599 = vpack.c.b16 %v561, %v559
        %v600 = vpack.c.b16 %v562, %v560
        %v601 = vpack.c.b16 %v565, %v563
        %v602 = vpack.c.b16 %v566, %v564
        %v603 = vpack.c.b16 %v569, %v567
        %v604 = vpack.c.b16 %v570, %v568
        %v605 = vpack.c.b16 %v573, %v571
        %v606 = vpack.c.b16 %v574, %v572
        %v642 = vunpack.c.l.b16 %v460
        %v643 = vunpack.c.l.b16 %v461
        %v644 = vunpack.c.l.b16 %v462
        %v645 = vunpack.c.l.b16 %v463
        %v646 = vunpack.c.l.b16 %v464
        %v647 = vunpack.c.l.b16 %v465
        %v648 = vunpack.c.l.b16 %v466
        %v649 = vunpack.c.l.b16 %v467
        %v650 = vunpack.c.l.b16 %v468
        %v651 = vunpack.c.l.b16 %v469
        %v652 = vunpack.c.l.b16 %v470
        %v653 = vunpack.c.l.b16 %v471
        %v654 = vunpack.c.l.b16 %v472
        %v655 = vunpack.c.l.b16 %v473
        %v656 = vunpack.c.l.b16 %v474
        %v657 = vunpack.c.l.b16 %v475
        %v658 = vunpack.c.l.b16 %v476
        %v659 = vunpack.c.l.b16 %v477
        %v660 = vunpack.c.l.b16 %v478
        %v661 = vpack.c.b16 %v643, %v642
        %v662 = vpack.c.b16 %v645, %v644
        %v663 = vpack.c.b16 %v647, %v646
        %v664 = vpack.c.b16 %v649, %v648
        %v665 = vpack.c.b16 %v651, %v650
        %v666 = vpack.c.b16 %v653, %v652
        %v667 = vpack.c.b16 %v655, %v654
        %v668 = vpack.c.b16 %v657, %v656
        %v669 = vpack.c.b16 %v659, %v658
        %v670 = vpack.c.b16 %v660, %v660
        %vm680 = vcmask 195584
        %v682 = vsel %vm680, %v576, 0
        %v685 = vsel %vm680, %v578, 0
        %v688 = vsel %vm680, %v580, 0
        %v691 = vsel %vm680, %v582, 0
        %v694 = vsel %vm680, %v584, 0
        %v697 = vsel %vm680, %v586, 0
        %v700 = vsel %vm680, %v588, 0
        %v703 = vsel %vm680, %v590, 0
        %v706 = vsel %vm680, %v592, 0
        %v709 = vsel %vm680, %v594, 0
        %v712 = vsel %vm680, %v596, 0
        %v715 = vsel %vm680, %v598, 0
        %v718 = vsel %vm680, %v600, 0
        %v721 = vsel %vm680, %v602, 0
        %v724 = vsel %vm680, %v604, 0
        %v727 = vsel %vm680, %v606, 0
        %vm729 = vcmask 1043456
        %v731 = vsel %vm729, %v670, 0
        %733 = vmatprep.subr.bf16.mxu0 0
        %734 = vmatpush1.bf16.msra.mxu0 %v661
        %735 = vmatprep.subr.bf16.mxu0 0
        %736 = vmatpush1.bf16.msra.mxu0 %v662
        %737 = vmatprep.subr.bf16.mxu0 0
        %738 = vmatpush1.bf16.msra.mxu0 %v663
        %739 = vmatprep.subr.bf16.mxu0 0
        %740 = vmatpush1.bf16.msra.mxu0 %v664
        %741 = vmatprep.subr.bf16.mxu0 0
        %742 = vmatpush1.bf16.msra.mxu0 %v665
        %743 = vmatprep.subr.bf16.mxu0 0
        %744 = vmatpush1.bf16.msra.mxu0 %v666
        %745 = vmatprep.subr.bf16.mxu0 0
        %746 = vmatpush1.bf16.msra.mxu0 %v667
        %747 = vmatprep.subr.bf16.mxu0 0
        %748 = vmatpush1.bf16.msra.mxu0 %v668
        %749 = vmatprep.subr.bf16.mxu0 0
        %750 = vmatpush1.bf16.msra.mxu0 %v669
        %751 = vmatprep.subr.bf16.mxu0 0
        %752 = vmatpush1.bf16.msra.mxu0 %v731
        %753 = vmatprep.subr.bf16.mxu0 0
        %754 = vmatpush1.bf16.msra.mxu0 0
        %755 = vmatprep.subr.bf16.mxu0 0
        %756 = vmatpush1.bf16.msra.mxu0 0
        %757 = vmatprep.subr.bf16.mxu0 0
        %758 = vmatpush1.bf16.msra.mxu0 0
        %759 = vmatprep.subr.bf16.mxu0 0
        %760 = vmatpush1.bf16.msra.mxu0 0
        %761 = vmatprep.subr.bf16.mxu0 0
        %762 = vmatpush1.bf16.msra.mxu0 0
        %763 = vmatprep.subr.bf16.mxu0 0
        %764 = vmatpush1.bf16.msra.mxu0 0
        %765 = vmatprep.mubr.bf16.mxu0 %v682
        %766 = vmatmul.mubr.bf16.gmra.mrb[0].mxu0 %v575
        %v767 = vpop.f32.mrb[0].mxu0
        %v768 = vadd.f32 0.0, %v767
        %v769 = vpop.f32.mrb[0].mxu0
        %v770 = vpop.f32.mrb[0].mxu0
        %v771 = vadd.f32 0.0, %v770
        %v772 = vpop.f32.mrb[0].mxu0
        %773 = vmatprep.mubr.bf16.mxu0 %v685
        %774 = vmatmul.mubr.bf16.gmra.mrb[0].mxu0 %v577
        %v775 = vpop.f32.mrb[0].mxu0
        %v776 = vadd.f32 0.0, %v775
        %v777 = vpop.f32.mrb[0].mxu0
        %v778 = vpop.f32.mrb[0].mxu0
        %v779 = vadd.f32 0.0, %v778
        %v780 = vpop.f32.mrb[0].mxu0
        %781 = vmatprep.mubr.bf16.mxu0 %v688
        %782 = vmatmul.mubr.bf16.gmra.mrb[0].mxu0 %v579
        %v783 = vpop.f32.mrb[0].mxu0
        %v784 = vadd.f32 0.0, %v783
        %v785 = vpop.f32.mrb[0].mxu0
        %v786 = vpop.f32.mrb[0].mxu0
        %v787 = vadd.f32 0.0, %v786
        %v788 = vpop.f32.mrb[0].mxu0
        %789 = vmatprep.mubr.bf16.mxu0 %v691
        %790 = vmatmul.mubr.bf16.gmra.mrb[0].mxu0 %v581
        %v791 = vpop.f32.mrb[0].mxu0
        %v792 = vadd.f32 0.0, %v791
        %v793 = vpop.f32.mrb[0].mxu0
        %v794 = vpop.f32.mrb[0].mxu0
        %v795 = vadd.f32 0.0, %v794
        %v796 = vpop.f32.mrb[0].mxu0
        %797 = vmatprep.mubr.bf16.mxu0 %v694
        %798 = vmatmul.mubr.bf16.gmra.mrb[0].mxu0 %v583
        %v799 = vpop.f32.mrb[0].mxu0
        %v800 = vadd.f32 0.0, %v799
        %v801 = vpop.f32.mrb[0].mxu0
        %v802 = vpop.f32.mrb[0].mxu0
        %v803 = vadd.f32 0.0, %v802
        %v804 = vpop.f32.mrb[0].mxu0
        %805 = vmatprep.mubr.bf16.mxu0 %v697
        %806 = vmatmul.mubr.bf16.gmra.mrb[0].mxu0 %v585
        %v807 = vpop.f32.mrb[0].mxu0
        %v808 = vadd.f32 0.0, %v807
        %v809 = vpop.f32.mrb[0].mxu0
        %v810 = vpop.f32.mrb[0].mxu0
        %v811 = vadd.f32 0.0, %v810
        %v812 = vpop.f32.mrb[0].mxu0
        %813 = vmatprep.mubr.bf16.mxu0 %v700
        %814 = vmatmul.mubr.bf16.gmra.mrb[0].mxu0 %v587
        %v815 = vpop.f32.mrb[0].mxu0
        %v816 = vadd.f32 0.0, %v815
        %v817 = vpop.f32.mrb[0].mxu0
        %v818 = vpop.f32.mrb[0].mxu0
        %v819 = vadd.f32 0.0, %v818
        %v820 = vpop.f32.mrb[0].mxu0
        %821 = vmatprep.mubr.bf16.mxu0 %v703
        %822 = vmatmul.mubr.bf16.gmra.mrb[0].mxu0 %v589
        %v823 = vpop.f32.mrb[0].mxu0
        %v824 = vadd.f32 0.0, %v823
        %v825 = vpop.f32.mrb[0].mxu0
        %v826 = vpop.f32.mrb[0].mxu0
        %v827 = vadd.f32 0.0, %v826
        %v828 = vpop.f32.mrb[0].mxu0
        %829 = vmatprep.mubr.bf16.mxu0 %v706
        %830 = vmatmul.mubr.bf16.gmra.mrb[0].mxu0 %v591
        %v831 = vpop.f32.mrb[0].mxu0
        %v832 = vadd.f32 0.0, %v831
        %v833 = vpop.f32.mrb[0].mxu0
        %v834 = vpop.f32.mrb[0].mxu0
        %v835 = vadd.f32 0.0, %v834
        %v836 = vpop.f32.mrb[0].mxu0
        %837 = vmatprep.mubr.bf16.mxu0 %v709
        %838 = vmatmul.mubr.bf16.gmra.mrb[0].mxu0 %v593
        %v839 = vpop.f32.mrb[0].mxu0
        %v840 = vadd.f32 0.0, %v839
        %v841 = vpop.f32.mrb[0].mxu0
        %v842 = vpop.f32.mrb[0].mxu0
        %v843 = vadd.f32 0.0, %v842
        %v844 = vpop.f32.mrb[0].mxu0
        %845 = vmatprep.mubr.bf16.mxu0 %v712
        %846 = vmatmul.mubr.bf16.gmra.mrb[0].mxu0 %v595
        %v847 = vpop.f32.mrb[0].mxu0
        %v848 = vadd.f32 0.0, %v847
        %v849 = vpop.f32.mrb[0].mxu0
        %v850 = vpop.f32.mrb[0].mxu0
        %v851 = vadd.f32 0.0, %v850
        %v852 = vpop.f32.mrb[0].mxu0
        %853 = vmatprep.mubr.bf16.mxu0 %v715
        %854 = vmatmul.mubr.bf16.gmra.mrb[0].mxu0 %v597
        %v855 = vpop.f32.mrb[0].mxu0
        %v856 = vadd.f32 0.0, %v855
        %v857 = vpop.f32.mrb[0].mxu0
        %v858 = vpop.f32.mrb[0].mxu0
        %v859 = vadd.f32 0.0, %v858
        %v860 = vpop.f32.mrb[0].mxu0
        %861 = vmatprep.mubr.bf16.mxu0 %v718
        %862 = vmatmul.mubr.bf16.gmra.mrb[0].mxu0 %v599
        %v863 = vpop.f32.mrb[0].mxu0
        %v864 = vadd.f32 0.0, %v863
        %v865 = vpop.f32.mrb[0].mxu0
        %v866 = vpop.f32.mrb[0].mxu0
        %v867 = vadd.f32 0.0, %v866
        %v868 = vpop.f32.mrb[0].mxu0
        %869 = vmatprep.mubr.bf16.mxu0 %v721
        %870 = vmatmul.mubr.bf16.gmra.mrb[0].mxu0 %v601
        %v871 = vpop.f32.mrb[0].mxu0
        %v872 = vadd.f32 0.0, %v871
        %v873 = vpop.f32.mrb[0].mxu0
        %v874 = vpop.f32.mrb[0].mxu0
        %v875 = vadd.f32 0.0, %v874
        %v876 = vpop.f32.mrb[0].mxu0
        %877 = vmatprep.mubr.bf16.mxu0 %v724
        %878 = vmatmul.mubr.bf16.gmra.mrb[0].mxu0 %v603
        %v879 = vpop.f32.mrb[0].mxu0
        %v880 = vadd.f32 0.0, %v879
        %v881 = vpop.f32.mrb[0].mxu0
        %v882 = vpop.f32.mrb[0].mxu0
        %v883 = vadd.f32 0.0, %v882
        %v884 = vpop.f32.mrb[0].mxu0
        %885 = vmatprep.mubr.bf16.mxu0 %v727
        %886 = vmatmul.mubr.bf16.gmra.mrb[0].mxu0 %v605
        %v887 = vpop.f32.mrb[0].mxu0
        %v888 = vadd.f32 0.0, %v887
        %v889 = vpop.f32.mrb[0].mxu0
        %v890 = vpop.f32.mrb[0].mxu0
        %v891 = vadd.f32 0.0, %v890
        %v892 = vpop.f32.mrb[0].mxu0
        %893 = vdwg.mxu0
        %v894 = vadd.f32 %v396, %v768
        %v895 = vadd.f32 %v397, %v771
        %v896 = vadd.f32 %v398, %v776
        %v897 = vadd.f32 %v399, %v779
        %v898 = vadd.f32 %v400, %v784
        %v899 = vadd.f32 %v401, %v787
        %v900 = vadd.f32 %v402, %v792
        %v901 = vadd.f32 %v403, %v795
        %v902 = vadd.f32 %v404, %v800
        %v903 = vadd.f32 %v405, %v803
        %v904 = vadd.f32 %v406, %v808
        %v905 = vadd.f32 %v407, %v811
        %v906 = vadd.f32 %v408, %v816
        %v907 = vadd.f32 %v409, %v819
        %v908 = vadd.f32 %v410, %v824
        %v909 = vadd.f32 %v411, %v827
        %v910 = vadd.f32 %v412, %v832
        %v911 = vadd.f32 %v413, %v835
        %v912 = vadd.f32 %v414, %v840
        %v913 = vadd.f32 %v415, %v843
        %v914 = vadd.f32 %v416, %v848
        %v915 = vadd.f32 %v417, %v851
        %v916 = vadd.f32 %v418, %v856
        %v917 = vadd.f32 %v419, %v859
        %v918 = vadd.f32 %v420, %v864
        %v919 = vadd.f32 %v421, %v867
        %v920 = vadd.f32 %v422, %v872
        %v921 = vadd.f32 %v423, %v875
        %v922 = vadd.f32 %v424, %v880
        %v923 = vadd.f32 %v425, %v883
        %v924 = vadd.f32 %v426, %v888
        %v925 = vadd.f32 %v427, %v891
        %926 = vst [vmem:[#allocation2] sm:$0xff] %v894
        %927 = vst [vmem:[#allocation2 + $0x8] sm:$0xff] %v895
        %928 = vst [vmem:[#allocation2 + $0x10] sm:$0xff] %v896
        %929 = vst [vmem:[#allocation2 + $0x18] sm:$0xff] %v897
        %930 = vst [vmem:[#allocation2 + $0x20] sm:$0xff] %v898
        %931 = vst [vmem:[#allocation2 + $0x28] sm:$0xff] %v899
        %932 = vst [vmem:[#allocation2 + $0x30] sm:$0xff] %v900
        %933 = vst [vmem:[#allocation2 + $0x38] sm:$0xff] %v901
        %934 = vst [vmem:[#allocation2 + $0x40] sm:$0xff] %v902
        %935 = vst [vmem:[#allocation2 + $0x48] sm:$0xff] %v903
        %936 = vst [vmem:[#allocation2 + $0x50] sm:$0xff] %v904
        %937 = vst [vmem:[#allocation2 + $0x58] sm:$0xff] %v905
        %938 = vst [vmem:[#allocation2 + $0x60] sm:$0xff] %v906
        %939 = vst [vmem:[#allocation2 + $0x68] sm:$0xff] %v907
        %940 = vst [vmem:[#allocation2 + $0x70] sm:$0xff] %v908
        %941 = vst [vmem:[#allocation2 + $0x78] sm:$0xff] %v909
        %942 = vst [vmem:[#allocation2 + $0x80] sm:$0xff] %v910
        %943 = vst [vmem:[#allocation2 + $0x88] sm:$0xff] %v911
        %944 = vst [vmem:[#allocation2 + $0x90] sm:$0xff] %v912
        %945 = vst [vmem:[#allocation2 + $0x98] sm:$0xff] %v913
        %946 = vst [vmem:[#allocation2 + $0xa0] sm:$0xff] %v914
        %947 = vst [vmem:[#allocation2 + $0xa8] sm:$0xff] %v915
        %948 = vst [vmem:[#allocation2 + $0xb0] sm:$0xff] %v916
        %949 = vst [vmem:[#allocation2 + $0xb8] sm:$0xff] %v917
        %950 = vst [vmem:[#allocation2 + $0xc0] sm:$0xff] %v918
        %951 = vst [vmem:[#allocation2 + $0xc8] sm:$0xff] %v919
        %952 = vst [vmem:[#allocation2 + $0xd0] sm:$0xff] %v920
        %953 = vst [vmem:[#allocation2 + $0xd8] sm:$0xff] %v921
        %954 = vst [vmem:[#allocation2 + $0xe0] sm:$0xff] %v922
        %955 = vst [vmem:[#allocation2 + $0xe8] sm:$0xff] %v923
        %956 = vst [vmem:[#allocation2 + $0xf0] sm:$0xff] %v924
        %957 = vst [vmem:[#allocation2 + $0xf8] sm:$0xff] %v925
        // Predicated region
        $region41: #{tpu_custom_call.1} parent=35 // pred_check
          %p958 = pneg %p360
        $region42: #{tpu_custom_call.1} parent=35 // pred_check_branch
          %960 = sbr.rel (%p958) target = $region44
        $region43: #{tpu_custom_call.1} parent=35 // pred_region
          %v961 = vld [vmem:[#allocation2] sm:$0xff]
          %v962 = vld [vmem:[#allocation2 + $0x8] sm:$0xff]
          %v963 = vld [vmem:[#allocation2 + $0x10] sm:$0xff]
          %v964 = vld [vmem:[#allocation2 + $0x18] sm:$0xff]
          %v965 = vld [vmem:[#allocation2 + $0x20] sm:$0xff]
          %v966 = vld [vmem:[#allocation2 + $0x28] sm:$0xff]
          %v967 = vld [vmem:[#allocation2 + $0x30] sm:$0xff]
          %v968 = vld [vmem:[#allocation2 + $0x38] sm:$0xff]
          %v969 = vld [vmem:[#allocation2 + $0x40] sm:$0xff]
          %v970 = vld [vmem:[#allocation2 + $0x48] sm:$0xff]
          %v971 = vld [vmem:[#allocation2 + $0x50] sm:$0xff]
          %v972 = vld [vmem:[#allocation2 + $0x58] sm:$0xff]
          %v973 = vld [vmem:[#allocation2 + $0x60] sm:$0xff]
          %v974 = vld [vmem:[#allocation2 + $0x68] sm:$0xff]
          %v975 = vld [vmem:[#allocation2 + $0x70] sm:$0xff]
          %v976 = vld [vmem:[#allocation2 + $0x78] sm:$0xff]
          %v977 = vld [vmem:[#allocation2 + $0x80] sm:$0xff]
          %v978 = vld [vmem:[#allocation2 + $0x88] sm:$0xff]
          %v979 = vld [vmem:[#allocation2 + $0x90] sm:$0xff]
          %v980 = vld [vmem:[#allocation2 + $0x98] sm:$0xff]
          %v981 = vld [vmem:[#allocation2 + $0xa0] sm:$0xff]
          %v982 = vld [vmem:[#allocation2 + $0xa8] sm:$0xff]
          %v983 = vld [vmem:[#allocation2 + $0xb0] sm:$0xff]
          %v984 = vld [vmem:[#allocation2 + $0xb8] sm:$0xff]
          %v985 = vld [vmem:[#allocation2 + $0xc0] sm:$0xff]
          %v986 = vld [vmem:[#allocation2 + $0xc8] sm:$0xff]
          %v987 = vld [vmem:[#allocation2 + $0xd0] sm:$0xff]
          %v988 = vld [vmem:[#allocation2 + $0xd8] sm:$0xff]
          %v989 = vld [vmem:[#allocation2 + $0xe0] sm:$0xff]
          %v990 = vld [vmem:[#allocation2 + $0xe8] sm:$0xff]
          %v991 = vld [vmem:[#allocation2 + $0xf0] sm:$0xff]
          %v992 = vld [vmem:[#allocation2 + $0xf8] sm:$0xff]
          %v993 = vld [vmem:[%s351] sm:$0x1]
          %v995 = vlaneseq
          %v996 = vshrl.u32 %v995, 7
          %v997 = vsub.s32 0, %v996
          %v998 = vrot.slane %v993, %v997
          %v1000 = vmul.f32 %v961, %v998
          %v1001 = vmul.f32 %v962, %v998
          %v1002 = vmul.f32 %v963, %v998
          %v1003 = vmul.f32 %v964, %v998
          %v1004 = vmul.f32 %v965, %v998
          %v1005 = vmul.f32 %v966, %v998
          %v1006 = vmul.f32 %v967, %v998
          %v1007 = vmul.f32 %v968, %v998
          %v1008 = vmul.f32 %v969, %v998
          %v1009 = vmul.f32 %v970, %v998
          %v1010 = vmul.f32 %v971, %v998
          %v1011 = vmul.f32 %v972, %v998
          %v1012 = vmul.f32 %v973, %v998
          %v1013 = vmul.f32 %v974, %v998
          %v1014 = vmul.f32 %v975, %v998
          %v1015 = vmul.f32 %v976, %v998
          %v1016 = vmul.f32 %v977, %v998
          %v1017 = vmul.f32 %v978, %v998
          %v1018 = vmul.f32 %v979, %v998
          %v1019 = vmul.f32 %v980, %v998
          %v1020 = vmul.f32 %v981, %v998
          %v1021 = vmul.f32 %v982, %v998
          %v1022 = vmul.f32 %v983, %v998
          %v1023 = vmul.f32 %v984, %v998
          %v1024 = vmul.f32 %v985, %v998
          %v1025 = vmul.f32 %v986, %v998
          %v1026 = vmul.f32 %v987, %v998
          %v1027 = vmul.f32 %v988, %v998
          %v1028 = vmul.f32 %v989, %v998
          %v1029 = vmul.f32 %v990, %v998
          %v1030 = vmul.f32 %v991, %v998
          %v1031 = vmul.f32 %v992, %v998
          %v1032 = vld [vmem:[%s357] sm:$0x1]
          %v1034 = vlaneseq
          %v1035 = vshrl.u32 %v1034, 7
          %v1036 = vsub.s32 0, %v1035
          %v1037 = vrot.slane %v1032, %v1036
          %v1039 = vadd.f32 %v1000, %v1037
          %v1040 = vadd.f32 %v1001, %v1037
          %v1041 = vadd.f32 %v1002, %v1037
          %v1042 = vadd.f32 %v1003, %v1037
          %v1043 = vadd.f32 %v1004, %v1037
          %v1044 = vadd.f32 %v1005, %v1037
          %v1045 = vadd.f32 %v1006, %v1037
          %v1046 = vadd.f32 %v1007, %v1037
          %v1047 = vadd.f32 %v1008, %v1037
          %v1048 = vadd.f32 %v1009, %v1037
          %v1049 = vadd.f32 %v1010, %v1037
          %v1050 = vadd.f32 %v1011, %v1037
          %v1051 = vadd.f32 %v1012, %v1037
          %v1052 = vadd.f32 %v1013, %v1037
          %v1053 = vadd.f32 %v1014, %v1037
          %v1054 = vadd.f32 %v1015, %v1037
          %v1055 = vadd.f32 %v1016, %v1037
          %v1056 = vadd.f32 %v1017, %v1037
          %v1057 = vadd.f32 %v1018, %v1037
          %v1058 = vadd.f32 %v1019, %v1037
          %v1059 = vadd.f32 %v1020, %v1037
          %v1060 = vadd.f32 %v1021, %v1037
          %v1061 = vadd.f32 %v1022, %v1037
          %v1062 = vadd.f32 %v1023, %v1037
          %v1063 = vadd.f32 %v1024, %v1037
          %v1064 = vadd.f32 %v1025, %v1037
          %v1065 = vadd.f32 %v1026, %v1037
          %v1066 = vadd.f32 %v1027, %v1037
          %v1067 = vadd.f32 %v1028, %v1037
          %v1068 = vadd.f32 %v1029, %v1037
          %v1069 = vadd.f32 %v1030, %v1037
          %v1070 = vadd.f32 %v1031, %v1037
          %v1071 = vmax.f32 %v1039, 0.0
          %v1072 = vmax.f32 %v1040, 0.0
          %v1073 = vmax.f32 %v1041, 0.0
          %v1074 = vmax.f32 %v1042, 0.0
          %v1075 = vmax.f32 %v1043, 0.0
          %v1076 = vmax.f32 %v1044, 0.0
          %v1077 = vmax.f32 %v1045, 0.0
          %v1078 = vmax.f32 %v1046, 0.0
          %v1079 = vmax.f32 %v1047, 0.0
          %v1080 = vmax.f32 %v1048, 0.0
          %v1081 = vmax.f32 %v1049, 0.0
          %v1082 = vmax.f32 %v1050, 0.0
          %v1083 = vmax.f32 %v1051, 0.0
          %v1084 = vmax.f32 %v1052, 0.0
          %v1085 = vmax.f32 %v1053, 0.0
          %v1086 = vmax.f32 %v1054, 0.0
          %v1087 = vmax.f32 %v1055, 0.0
          %v1088 = vmax.f32 %v1056, 0.0
          %v1089 = vmax.f32 %v1057, 0.0
          %v1090 = vmax.f32 %v1058, 0.0
          %v1091 = vmax.f32 %v1059, 0.0
          %v1092 = vmax.f32 %v1060, 0.0
          %v1093 = vmax.f32 %v1061, 0.0
          %v1094 = vmax.f32 %v1062, 0.0
          %v1095 = vmax.f32 %v1063, 0.0
          %v1096 = vmax.f32 %v1064, 0.0
          %v1097 = vmax.f32 %v1065, 0.0
          %v1098 = vmax.f32 %v1066, 0.0
          %v1099 = vmax.f32 %v1067, 0.0
          %v1100 = vmax.f32 %v1068, 0.0
          %v1101 = vmax.f32 %v1069, 0.0
          %v1102 = vmax.f32 %v1070, 0.0
          %1103 = vst [vmem:[%s316] sm:$0xff] %v1071
          %1104 = vst [vmem:[%s316 + $0x8] sm:$0xff] %v1072
          %1105 = vst [vmem:[%s316 + $0x10] sm:$0xff] %v1073
          %1106 = vst [vmem:[%s316 + $0x18] sm:$0xff] %v1074
          %1107 = vst [vmem:[%s316 + $0x20] sm:$0xff] %v1075
          %1108 = vst [vmem:[%s316 + $0x28] sm:$0xff] %v1076
          %1109 = vst [vmem:[%s316 + $0x30] sm:$0xff] %v1077
          %1110 = vst [vmem:[%s316 + $0x38] sm:$0xff] %v1078
          %1111 = vst [vmem:[%s316 + $0x40] sm:$0xff] %v1079
          %1112 = vst [vmem:[%s316 + $0x48] sm:$0xff] %v1080
          %1113 = vst [vmem:[%s316 + $0x50] sm:$0xff] %v1081
          %1114 = vst [vmem:[%s316 + $0x58] sm:$0xff] %v1082
          %1115 = vst [vmem:[%s316 + $0x60] sm:$0xff] %v1083
          %1116 = vst [vmem:[%s316 + $0x68] sm:$0xff] %v1084
          %1117 = vst [vmem:[%s316 + $0x70] sm:$0xff] %v1085
          %1118 = vst [vmem:[%s316 + $0x78] sm:$0xff] %v1086
          %1119 = vst [vmem:[%s316 + $0x80] sm:$0xff] %v1087
          %1120 = vst [vmem:[%s316 + $0x88] sm:$0xff] %v1088
          %1121 = vst [vmem:[%s316 + $0x90] sm:$0xff] %v1089
          %1122 = vst [vmem:[%s316 + $0x98] sm:$0xff] %v1090
          %1123 = vst [vmem:[%s316 + $0xa0] sm:$0xff] %v1091
          %1124 = vst [vmem:[%s316 + $0xa8] sm:$0xff] %v1092
          %1125 = vst [vmem:[%s316 + $0xb0] sm:$0xff] %v1093
          %1126 = vst [vmem:[%s316 + $0xb8] sm:$0xff] %v1094
          %1127 = vst [vmem:[%s316 + $0xc0] sm:$0xff] %v1095
          %1128 = vst [vmem:[%s316 + $0xc8] sm:$0xff] %v1096
          %1129 = vst [vmem:[%s316 + $0xd0] sm:$0xff] %v1097
          %1130 = vst [vmem:[%s316 + $0xd8] sm:$0xff] %v1098
          %1131 = vst [vmem:[%s316 + $0xe0] sm:$0xff] %v1099
          %1132 = vst [vmem:[%s316 + $0xe8] sm:$0xff] %v1100
          %1133 = vst [vmem:[%s316 + $0xf0] sm:$0xff] %v1101
          %1134 = vst [vmem:[%s316 + $0xf8] sm:$0xff] %v1102
        $region44: #{tpu_custom_call.1} parent=35 // pred_fallthru
          _
        %s1135 = sand.u32 %s172, 1
        %s1136 = scalar_lea.sflag [#allocation4], %s1135
        %s1137 = sand.u32 %s172, 1
        %s1138 = smul.addr %s1137, 256
        %s1139 = scalar_lea.vmem [#allocation3], %s1138
        // Predicated region
        $region45: #{tpu_custom_call.1} parent=35 // pred_check
          %p1140 = pneg %p182
        $region46: #{tpu_custom_call.1} parent=35 // pred_check_branch
          %1142 = sbr.rel (%p1140) target = $region48
        $region47: #{tpu_custom_call.1} parent=35 // pred_region
          %s1143 = smul.u32 32, %s25
          %s1145 = ssub.s32 4096, 4096
          %1146 = vsyncadd %s1136, %s1145
          %s1147 = sadd.s32 %s26, %s1143
          %s1148 = smul.addr %s24, 128
          %s1149 = sadd.s32 %s1147, %s1148
          %s1150 = smul.addr %s1149, 128
          %s1151 = scalar_lea.hbm %s4, %s1150
          %s1152 = sshll.u32 %s1139, 4
          %s1153 = int_to_ptr.vmem [resolvable:$true] %s1152
          %1158 = dma.vmem_to_hbm [thread:$0]  %s1153, 4096, %s1151, %s1136, 128, 128, 8
        $region48: #{tpu_custom_call.1} parent=35 // pred_fallthru
          _
      $region36: #{tpu_custom_call.1} parent=5 // pred_fallthru
        _
      %p1159 = scmp.le.s32.totalorder 2, %s13
      // Predicated region
      $region49: #{tpu_custom_call.1} parent=5 // pred_check
        %p1160 = pneg %p1159
      $region50: #{tpu_custom_call.1} parent=5 // pred_check_branch
        %1162 = sbr.rel (%p1160) target = $region52
      $region51: #{tpu_custom_call.1} parent=5 // pred_region
        %s1163 = ssub.s32 %s13, 2
        // Predicated region
        $region53: #{tpu_custom_call.1} parent=51 // pred_check
          %p1164 = pneg %p188
        $region54: #{tpu_custom_call.1} parent=51 // pred_check_branch
          %1166 = sbr.rel (%p1164) target = $region56
        $region55: #{tpu_custom_call.1} parent=51 // pred_region
          %s1167 = sand.u32 %s173, 1
          %s1168 = scalar_lea.sflag [#allocation4], %s1167
          %s1169 = sand.u32 %s173, 1
          %s1170 = smul.addr %s1169, 256
          %s1171 = scalar_lea.vmem [#allocation3], %s1170
          %1172 = dma.done %s1168, 4096
        $region56: #{tpu_custom_call.1} parent=51 // pred_fallthru
          _
      $region52: #{tpu_custom_call.1} parent=5 // pred_fallthru
        _
    $region6: #{tpu_custom_call.1} parent=1 // loop_footer
      %s17 = sadd.s32 1, %s13
    $region7: #{tpu_custom_call.1} parent=1 // loop_footer_branch
      %12 = sbr.rel target = $region3
    $region8: #{tpu_custom_call.1} parent=1 // loop_exit
      _
    %1173 = vsyncpa [#allocation4], 1
    %s1174 = scalar_lea.sflag [#allocation4], 1
    %1175 = vsyncpa %s1174, 1

</llo_original>
